<compile_context>
chip_gen: v7x
topology: tpu7x:2x2x1
jax: 0.10.0
libtpu: 0.0.40
codegen_flags: <defaults>
</compile_context>

<pallas_src>
import math
from functools import partial

import jax
import jax.numpy as jnp
from jax.experimental import pallas as pl
from jax.experimental.pallas import tpu as pltpu


# ----------------------------------------------------------------------------
# Buffer construction (deterministic, matches torch __init__)
# ----------------------------------------------------------------------------
def make_positional_encoding(d_model: int, max_len: int = 30) -> jnp.ndarray:
    """Sinusoidal positional-encoding buffer, shape (max_len, 1, d_model), fp32."""
    position = jnp.arange(0, max_len, dtype=jnp.float32)[:, None]            # (max_len, 1)
    div_term = jnp.exp(
        jnp.arange(0, d_model, 2, dtype=jnp.float32) * (-math.log(10000.0) / d_model)
    )                                                                         # (d_model/2,)
    angles = position * div_term                                              # (max_len, d_model/2)
    pe = jnp.zeros((max_len, d_model), dtype=jnp.float32)
    pe = pe.at[:, 0::2].set(jnp.sin(angles))
    pe = pe.at[:, 1::2].set(jnp.cos(angles))
    # unsqueeze(0).transpose(0, 1)  ->  (max_len, 1, d_model)
    return pe[:, None, :]


# ----------------------------------------------------------------------------
# Pallas kernel: broadcast add of a tiny pe tile onto an x tile
# ----------------------------------------------------------------------------
def pe_add_kernel(x_ref, pe_ref, o_ref):
    # x_ref / o_ref: (tile_s, B, tile_d);  pe_ref: (tile_s, 1, tile_d) fp32.
    # pe broadcasts over the batch (sublane) dim in-register: cheap VPU work,
    # completely hidden under the HBM load/store bottleneck of this add.
    o_ref[...] = (x_ref[...].astype(jnp.float32) + pe_ref[...]).astype(o_ref.dtype)
    # Dropout p=0.0 -> identity.
    # TODO(synk): for p > 0, fuse pltpu.prng_seed + pltpu.prng_random_bits +
    # jnp.where here (free under the mem bottleneck) instead of a second pass.


# ----------------------------------------------------------------------------
# Tiling policy
# ----------------------------------------------------------------------------
def _choose_tiles(s, b, d, itemsize, target_block_bytes):
    """Pick (tile_s, tile_d) so one x/out block stays under target_block_bytes."""
    tile_d = d
    row_bytes = b * d * itemsize                       # one seq-row of x
    # Only chunk D when a single seq-row already exceeds the budget AND D can
    # be split into lane-dense 128-multiples (keeps vst unmasked).
    if row_bytes > target_block_bytes and d % 128 == 0 and d > 128:
        tile_d = max(128, ((target_block_bytes // (b * itemsize)) // 128) * 128)
        tile_d = min(tile_d, d)
        row_bytes = b * tile_d * itemsize
    # TODO(synk): if D is ragged (not a 128-multiple) and a single seq-row is
    # still over budget, pad D to the next 128-multiple in the wrapper.
    tile_s = max(1, min(s, target_block_bytes // max(1, row_bytes)))

    # v7x megacore: make sure the "parallel" S axis has >= 2 blocks for large
    # inputs so both TensorCores get work (no-op on 1-TC v5e/v6e).
    total_bytes = s * b * d * itemsize
    if tile_s >= s and s > 1 and total_bytes >= (1 << 20):
        tile_s = pl.cdiv(s, 2)
    return tile_s, tile_d


# ----------------------------------------------------------------------------
# Wrapper
# ----------------------------------------------------------------------------
@partial(jax.jit, static_argnames=("target_block_bytes",))
def positional_encoding_forward(
    x: jnp.ndarray,
    pe: jnp.ndarray,
    *,
    # ~4 MiB x-blocks: with 2 big streams (x in, out) double-buffered plus the
    # tiny pe tile, the pipelined footprint is ~16 MiB; vmem_limit_bytes below
    # is derived from the actual footprint and stays under v7x's 64 MiB.
    target_block_bytes: int = 4 * 1024 * 1024,
) -> jnp.ndarray:
    """x: (S, B, D), pe: (max_len, 1, D) fp32. Returns dropout(x + pe[:S]) with p=0."""
    assert x.ndim == 3 and pe.ndim == 3, "expected x=(S,B,D), pe=(max_len,1,D)"
    s, b, d = x.shape
    assert s <= pe.shape[0], f"seq_len {s} exceeds max_len {pe.shape[0]}"
    assert d == pe.shape[2], "d_model mismatch between x and pe"
    itemsize = jnp.dtype(x.dtype).itemsize

    pe_s = pe[:s]                                      # (S, 1, D) fp32 — tiny

    tile_s, tile_d = _choose_tiles(s, b, d, itemsize, target_block_bytes)
    grid = (pl.cdiv(s, tile_s), pl.cdiv(d, tile_d))

    x_spec = pl.BlockSpec((tile_s, b, tile_d), lambda i, j: (i, 0, j))
    pe_spec = pl.BlockSpec((tile_s, 1, tile_d), lambda i, j: (i, 0, j))

    # Double-buffered VMEM footprint: x-in + out (big) + pe (tiny), 2 deep.
    block_bytes = tile_s * b * tile_d * itemsize
    pe_block_bytes = tile_s * tile_d * 4
    footprint = 2 * (2 * block_bytes + pe_block_bytes)
    vmem_limit = int(min(max(2 * footprint, 16 << 20), 48 << 20))

    n = s * b * d
    cost = pl.CostEstimate(
        flops=n,                                       # one add per element
        transcendentals=0,
        bytes_accessed=2 * n * itemsize + s * d * 4,   # read x + write out + read pe
    )

    out = pl.pallas_call(
        pe_add_kernel,
        out_shape=jax.ShapeDtypeStruct((s, b, d), x.dtype),
        grid=grid,
        in_specs=[x_spec, pe_spec],
        out_specs=x_spec,
        compiler_params=pltpu.CompilerParams(
            dimension_semantics=("parallel", "parallel"),
            vmem_limit_bytes=vmem_limit,
        ),
        cost_estimate=cost,
    )(x, pe_s)
    return out


# ----------------------------------------------------------------------------
# Main
# ----------------------------------------------------------------------------
if __name__ == "__main__":
    d_model = 32
    max_len = 30
    seq_len = 8
    batch = 2

    pe = make_positional_encoding(d_model, max_len)

    key = jax.random.PRNGKey(0)
    x = jax.random.normal(key, (seq_len, batch, d_model), dtype=jnp.float32)

    out = positional_encoding_forward(x, pe)
    out = jax.block_until_ready(out)

    # Pure-JAX reference check
    ref = x + pe[:seq_len]
    assert out.shape == x.shape and out.dtype == x.dtype
    assert jnp.allclose(out, ref, atol=1e-6, rtol=1e-6)

    print("KERNEL_OK")
</pallas_src>

<mosaic_0001>
module attributes {stable_mosaic.version = 11 : i64} {
  func.func @pe_add_kernel(%arg0: i32, %arg1: i32, %arg2: memref<8x2x32xf32, #tpu.memory_space<vmem>>, %arg3: memref<8x1x32xf32, #tpu.memory_space<vmem>>, %arg4: memref<8x2x32xf32, #tpu.memory_space<vmem>>) attributes {dimension_semantics = [#tpu.dimension_semantics<parallel>, #tpu.dimension_semantics<parallel>], iteration_bounds = array<i64: 1, 1>, scalar_prefetch = 0 : i64, scratch_operands = 0 : i64, tpu.core_type = #tpu.core_type<tc>, window_params = [{transform_indices = @transform_0, window_bounds = array<i64: 8, 2, 32>}, {transform_indices = @transform_1, window_bounds = array<i64: 8, 1, 32>}, {transform_indices = @transform_2, window_bounds = array<i64: 8, 2, 32>}]} {
    %c0 = arith.constant 0 : index
    %c0_0 = arith.constant 0 : index
    %c0_1 = arith.constant 0 : index
    %0 = vector.load %arg2[%c0, %c0_0, %c0_1] : memref<8x2x32xf32, #tpu.memory_space<vmem>>, vector<8x2x32xf32>
    %c0_2 = arith.constant 0 : index
    %c0_3 = arith.constant 0 : index
    %c0_4 = arith.constant 0 : index
    %1 = vector.load %arg3[%c0_2, %c0_3, %c0_4] : memref<8x1x32xf32, #tpu.memory_space<vmem>>, vector<8x1x32xf32>
    %2 = vector.broadcast %1 : vector<8x1x32xf32> to vector<8x2x32xf32>
    %3 = arith.addf %0, %2 : vector<8x2x32xf32>
    %c0_5 = arith.constant 0 : index
    %c0_6 = arith.constant 0 : index
    %c0_7 = arith.constant 0 : index
    %4 = vector.load %arg4[%c0_5, %c0_6, %c0_7] : memref<8x2x32xf32, #tpu.memory_space<vmem>>, vector<8x2x32xf32>
    tpu.vector_store %arg4[%c0_5, %c0_6, %c0_7], %3 {strides = array<i32>} : memref<8x2x32xf32, #tpu.memory_space<vmem>>, vector<8x2x32xf32>,
    return
  }
  func.func @transform_0(%arg0: i32, %arg1: i32) -> (i32, i32, i32) {
    %c0_i32 = arith.constant 0 : i32
    %c0_i32_0 = arith.constant 0 : i32
    return %arg0, %c0_i32, %arg1 : i32, i32, i32
  }
  func.func @transform_1(%arg0: i32, %arg1: i32) -> (i32, i32, i32) {
    %c0_i32 = arith.constant 0 : i32
    %c0_i32_0 = arith.constant 0 : i32
    return %arg0, %c0_i32, %arg1 : i32, i32, i32
  }
  func.func @transform_2(%arg0: i32, %arg1: i32) -> (i32, i32, i32) {
    %c0_i32 = arith.constant 0 : i32
    %c0_i32_0 = arith.constant 0 : i32
    return %arg0, %c0_i32, %arg1 : i32, i32, i32
  }
}

</mosaic_0001>

<llo_original>
// kernel: positional_encoding_forward.1
$region0: #{positional_encoding_forward.1}
  #allocation0 [shape = 'u32[]', space=smem, size = 0x4, offset = 0x4, fixed_abs, tag = 'smem constant byte address 0x4 - core index']
  #allocation1 [shape = 'u32[144,128]{1,0:T(1,128)}', space=vmem, size = 0x12000, scoped, tag = 'internal scratch']
  %s0 = inlined_call_operand.hbm [shape: f32[8,2,32], index: 0, kind: input, shape index: {}]
  %s1 = inlined_call_operand.vmem [shape: f32[8,1,32], index: 1, kind: input, shape index: {}]
  %s2 = inlined_call_operand.hbm [shape: f32[8,2,32], index: 2, kind: output, shape index: {}]
  %s3 = sld [smem:[#allocation0]]
  $region22: #{positional_encoding_forward.1} parent=0
    _
  %s5 = ssub.s32 1, %s3
  %s6 = scalar_select 0, %s5, %s3
  $region1: #{positional_encoding_forward.1} parent=0
    #allocation2 [shape = 'u8[8192]{0}', space=vmem, size = 0x2000, scoped, tag = 'input window, operand 0, single buffered']
    #allocation3 [shape = 's32[1]{0}', space=sflag, size = 0x4, scoped, tag = 'scoped memory for positional_encoding_forward.1']
    #allocation4 [shape = 's32[1]{0}', space=sflag, size = 0x4, scoped, tag = 'scoped memory for positional_encoding_forward.1']
    #allocation5 [shape = 'u8[8192]{0}', space=vmem, size = 0x2000, scoped, tag = 'output window, operand 0, single buffered']
    %7 = vsyncpa [#allocation3], 0
    %8 = vsyncpa [#allocation4], 0
    // Predicated region
    $region2: #{positional_encoding_forward.1} parent=1 // pred_check
      _
    $region3: #{positional_encoding_forward.1} parent=1 // pred_check_branch
      %10 = sbr.rel (0) target = $region5
    $region4: #{positional_encoding_forward.1} parent=1 // pred_region
      %s12 = ssub.s32 256, 256
      %13 = vsyncadd [#allocation3], %s12
      %s14 = sshll.u32 [#allocation2], 4
      %s15 = int_to_ptr.vmem [resolvable:$true] %s14
      %20 = dma.hbm_to_vmem [thread:$0]  %s0, 256, %s15, [#allocation3], 32, 32, 2
    $region5: #{positional_encoding_forward.1} parent=1 // pred_fallthru
      _
    // Predicated region
    $region6: #{positional_encoding_forward.1} parent=1 // pred_check
      _
    $region7: #{positional_encoding_forward.1} parent=1 // pred_check_branch
      %22 = sbr.rel (0) target = $region9
    $region8: #{positional_encoding_forward.1} parent=1 // pred_region
      _
    $region9: #{positional_encoding_forward.1} parent=1 // pred_fallthru
      _
    // Predicated region
    $region10: #{positional_encoding_forward.1} parent=1 // pred_check
      _
    $region11: #{positional_encoding_forward.1} parent=1 // pred_check_branch
      %24 = sbr.rel (0) target = $region13
    $region12: #{positional_encoding_forward.1} parent=1 // pred_region
      %25 = dma.done [#allocation3], 256
    $region13: #{positional_encoding_forward.1} parent=1 // pred_fallthru
      _
    %v26 = vld [vmem:[#allocation2] sm:$0x3]
    %v27 = vld [vmem:[#allocation2 + $0x2] sm:$0x3]
    %v28 = vld [vmem:[#allocation2 + $0x4] sm:$0x3]
    %v29 = vld [vmem:[#allocation2 + $0x6] sm:$0x3]
    %v30 = vld [vmem:[#allocation2 + $0x8] sm:$0x3]
    %v31 = vld [vmem:[#allocation2 + $0xa] sm:$0x3]
    %v32 = vld [vmem:[#allocation2 + $0xc] sm:$0x3]
    %v33 = vld [vmem:[#allocation2 + $0xe] sm:$0x3]
    %v34 = vld [vmem:[%s1] sm:$0x1]
    %v35 = vld [vmem:[%s1 + $0x1] sm:$0x1]
    %v36 = vld [vmem:[%s1 + $0x2] sm:$0x1]
    %v37 = vld [vmem:[%s1 + $0x3] sm:$0x1]
    %v38 = vld [vmem:[%s1 + $0x4] sm:$0x1]
    %v39 = vld [vmem:[%s1 + $0x5] sm:$0x1]
    %v40 = vld [vmem:[%s1 + $0x6] sm:$0x1]
    %v41 = vld [vmem:[%s1 + $0x7] sm:$0x1]
    %v50 = vlaneseq
    %v51 = vshrl.u32 %v50, 7
    %v52 = vsub.s32 0, %v51
    %v53 = vrot.slane %v34, %v52
    %v54 = vlaneseq
    %v55 = vshrl.u32 %v54, 7
    %v56 = vsub.s32 0, %v55
    %v57 = vrot.slane %v35, %v56
    %v58 = vlaneseq
    %v59 = vshrl.u32 %v58, 7
    %v60 = vsub.s32 0, %v59
    %v61 = vrot.slane %v36, %v60
    %v62 = vlaneseq
    %v63 = vshrl.u32 %v62, 7
    %v64 = vsub.s32 0, %v63
    %v65 = vrot.slane %v37, %v64
    %v66 = vlaneseq
    %v67 = vshrl.u32 %v66, 7
    %v68 = vsub.s32 0, %v67
    %v69 = vrot.slane %v38, %v68
    %v70 = vlaneseq
    %v71 = vshrl.u32 %v70, 7
    %v72 = vsub.s32 0, %v71
    %v73 = vrot.slane %v39, %v72
    %v74 = vlaneseq
    %v75 = vshrl.u32 %v74, 7
    %v76 = vsub.s32 0, %v75
    %v77 = vrot.slane %v40, %v76
    %v78 = vlaneseq
    %v79 = vshrl.u32 %v78, 7
    %v80 = vsub.s32 0, %v79
    %v81 = vrot.slane %v41, %v80
    %v90 = vadd.f32 %v26, %v53
    %v91 = vadd.f32 %v27, %v57
    %v92 = vadd.f32 %v28, %v61
    %v93 = vadd.f32 %v29, %v65
    %v94 = vadd.f32 %v30, %v69
    %v95 = vadd.f32 %v31, %v73
    %v96 = vadd.f32 %v32, %v77
    %v97 = vadd.f32 %v33, %v81
    %vm98 = vcmask 254976
    %99 = vst.msk [vmem:[#allocation5] sm:$0x3] %vm98, %v90
    %100 = vst.msk [vmem:[#allocation5 + $0x2] sm:$0x3] %vm98, %v91
    %101 = vst.msk [vmem:[#allocation5 + $0x4] sm:$0x3] %vm98, %v92
    %102 = vst.msk [vmem:[#allocation5 + $0x6] sm:$0x3] %vm98, %v93
    %103 = vst.msk [vmem:[#allocation5 + $0x8] sm:$0x3] %vm98, %v94
    %104 = vst.msk [vmem:[#allocation5 + $0xa] sm:$0x3] %vm98, %v95
    %105 = vst.msk [vmem:[#allocation5 + $0xc] sm:$0x3] %vm98, %v96
    %106 = vst.msk [vmem:[#allocation5 + $0xe] sm:$0x3] %vm98, %v97
    // Predicated region
    $region14: #{positional_encoding_forward.1} parent=1 // pred_check
      _
    $region15: #{positional_encoding_forward.1} parent=1 // pred_check_branch
      %108 = sbr.rel (0) target = $region17
    $region16: #{positional_encoding_forward.1} parent=1 // pred_region
      %s110 = ssub.s32 256, 256
      %111 = vsyncadd [#allocation4], %s110
      %s112 = sshll.u32 [#allocation5], 4
      %s113 = int_to_ptr.vmem [resolvable:$true] %s112
      %118 = dma.vmem_to_hbm [thread:$0]  %s113, 256, %s2, [#allocation4], 32, 32, 2
    $region17: #{positional_encoding_forward.1} parent=1 // pred_fallthru
      _
    // Predicated region
    $region18: #{positional_encoding_forward.1} parent=1 // pred_check
      _
    $region19: #{positional_encoding_forward.1} parent=1 // pred_check_branch
      %120 = sbr.rel (0) target = $region21
    $region20: #{positional_encoding_forward.1} parent=1 // pred_region
      %121 = dma.done [#allocation4], 256
    $region21: #{positional_encoding_forward.1} parent=1 // pred_fallthru
      _
    %122 = vsyncpa [#allocation3], 1
    %123 = vsyncpa [#allocation4], 1

</llo_original>
